<compile_context>
chip_gen: v7x
topology: tpu7x:2x2x1
jax: 0.10.0
libtpu: 0.0.40
codegen_flags: <defaults>
</compile_context>

<pallas_src>
import jax
import jax.numpy as jnp
from jax.experimental import pallas as pl
from jax.experimental.pallas import tpu as pltpu


# ----------------------------------------------------------------------------
# Kernels
# ----------------------------------------------------------------------------
def _recompute_kernel(t_ref, w1_ref, b1_ref, w2_ref, b2_ref, o_ref):
    # h = SiLU(t @ w1 + b1), recomputed per output-column tile.  t/w1/b1 have a
    # constant block index so they stay VMEM-resident; the recompute is a few
    # MFLOPs at small B and is correct when the "parallel" grid axis is split
    # across v7x's two TensorCores.
    h = jnp.dot(t_ref[...].astype(w1_ref.dtype), w1_ref[...],
                preferred_element_type=jnp.float32)
    h = h + b1_ref[...]                       # bias broadcast over batch rows
    h = h * jax.nn.sigmoid(h)                 # SiLU; sigmoid lowers to the EUP
    # Second linear on this output-column tile: (B, H) @ (H, tn) + bias.
    y = jnp.dot(h.astype(w2_ref.dtype), w2_ref[...],
                preferred_element_type=jnp.float32)
    y = y + b2_ref[...]
    o_ref[...] = y.astype(o_ref.dtype)


def _cached_kernel(t_ref, w1_ref, b1_ref, w2_ref, b2_ref, o_ref, h_ref):
    # Large-batch variant: compute h once on the first grid step and cache it
    # in VMEM scratch.  REQUIRES dimension_semantics=("arbitrary",) so every
    # step sees the j==0 initialisation (do NOT mark this axis "parallel").
    @pl.when(pl.program_id(0) == 0)
    def _():
        h = jnp.dot(t_ref[...].astype(w1_ref.dtype), w1_ref[...],
                    preferred_element_type=jnp.float32)
        h = h + b1_ref[...]
        h = h * jax.nn.sigmoid(h)
        h_ref[...] = h.astype(h_ref.dtype)

    y = jnp.dot(h_ref[...], w2_ref[...], preferred_element_type=jnp.float32)
    y = y + b2_ref[...]
    o_ref[...] = y.astype(o_ref.dtype)


# ----------------------------------------------------------------------------
# Wrapper
# ----------------------------------------------------------------------------
def prepare_time_embedding_params(w1, b1, w2, b2, *, weight_dtype=jnp.bfloat16):
    """Cast/reshape parameters ONCE (model-load time).

    The weights are persisted in `weight_dtype` (default bf16) so the hot path
    never pays an extra f32->bf16 HBM round trip; biases stay f32 (tiny) and
    are pre-reshaped to (1, H) rows.
    """
    H = w1.shape[1]
    return (w1.astype(weight_dtype),
            b1.reshape(1, H).astype(jnp.float32),
            w2.astype(weight_dtype),
            b2.reshape(1, H).astype(jnp.float32))


def _pick_tn(H):
    # Largest multiple of 128 that divides H and yields >= 2 grid steps, so w2
    # is pipelined/double-buffered and v7x can split the column tiles across
    # its 2 TensorCores.  Prefer tiles that give an EVEN grid (ideally exactly
    # 2): H=1280 -> tn=640 (2 steps), H=256 -> tn=128 (2 steps).
    cands = [c for c in range(128, H, 128) if H % c == 0]
    if not cands:
        return H          # no lane-aligned proper divisor: single resident block
    even = [c for c in cands if (H // c) % 2 == 0]
    return max(even) if even else max(cands)


def time_embedding(t, w1, b1, w2, b2, *, tn=None, cache_h=None,
                   out_dtype=jnp.float32):
    """TimeEmbedding forward: Linear -> SiLU -> Linear.

    t:  (B, dims)         -- batch timesteps up (B>=64..256) when possible to
                             amortise the weight DMA.
    w1: (dims, 4*dims)    -- transpose of PyTorch linear_1.weight (pre-cast,
                             e.g. bf16, via prepare_time_embedding_params).
    b1: (4*dims,) or (1, 4*dims)
    w2: (4*dims, 4*dims)  -- transpose of PyTorch linear_2.weight (pre-cast).
    b2: (4*dims,) or (1, 4*dims)
    """
    B, D = t.shape
    H = w1.shape[1]
    assert w1.shape == (D, H) and w2.shape == (H, H)
    b1 = b1.reshape(1, H)
    b2 = b2.reshape(1, H)

    if tn is None:
        tn = _pick_tn(H)
    assert H % tn == 0 and (tn % 128 == 0 or tn == H)
    grid = (H // tn,)

    # Recompute h per tile at small B (free, parallel-safe); cache it in VMEM
    # scratch with a sequential axis at large B.
    if cache_h is None:
        cache_h = (B >= 128) and (grid[0] > 1)

    in_specs = [
        pl.BlockSpec((B, D), lambda j: (0, 0)),    # t   (VMEM-resident)
        pl.BlockSpec((D, H), lambda j: (0, 0)),    # w1  (VMEM-resident)
        pl.BlockSpec((1, H), lambda j: (0, 0)),    # b1  (VMEM-resident)
        pl.BlockSpec((H, tn), lambda j: (0, j)),   # w2  column tiles (pipelined)
        pl.BlockSpec((1, tn), lambda j: (0, j)),   # b2  column tiles
    ]
    out_spec = pl.BlockSpec((B, tn), lambda j: (0, j))

    # VMEM residency estimate (double-buffered operands); only used to decide
    # whether to raise the scoped-VMEM limit above v5e's 16 MiB default.
    w_bytes = jnp.dtype(w1.dtype).itemsize
    est = 2 * (B * D * jnp.dtype(t.dtype).itemsize
               + D * H * w_bytes + H * 4
               + H * tn * w_bytes + tn * 4
               + B * tn * jnp.dtype(out_dtype).itemsize)
    if cache_h:
        est += B * H * w_bytes
    cp_kwargs = {}
    if est > 12 * 1024 * 1024:
        # Keep headroom but never exceed v7x's 64 MiB physical VMEM per TC.
        cp_kwargs["vmem_limit_bytes"] = min(64 * 1024 * 1024, int(est * 1.5))

    if cache_h:
        kernel = _cached_kernel
        scratch_shapes = [pltpu.VMEM((B, H), w1.dtype)]
        semantics = ("arbitrary",)   # required for the j==0 scratch init
    else:
        kernel = _recompute_kernel
        scratch_shapes = []
        semantics = ("parallel",)    # v7x: shard column tiles across 2 TCs

    return pl.pallas_call(
        kernel,
        out_shape=jax.ShapeDtypeStruct((B, H), out_dtype),
        grid=grid,
        in_specs=in_specs,
        out_specs=out_spec,
        scratch_shapes=scratch_shapes,
        compiler_params=pltpu.CompilerParams(
            dimension_semantics=semantics, **cp_kwargs),
    )(t, w1, b1, w2, b2)


def reference(t, w1, b1, w2, b2):
    h = t @ w1 + b1
    h = h * jax.nn.sigmoid(h)
    return h @ w2 + b2


# ----------------------------------------------------------------------------
# Self-test
# ----------------------------------------------------------------------------
if __name__ == "__main__":
    # Small shapes consistent with the module: dims=64 (instead of 320),
    # hidden = 4*dims = 256; the default tn picker gives tn=128 -> 2 grid steps.
    B, dims = 8, 64
    hidden = 4 * dims

    key = jax.random.PRNGKey(0)
    k_t, k_w1, k_b1, k_w2, k_b2 = jax.random.split(key, 5)

    t = jax.random.normal(k_t, (B, dims), dtype=jnp.float32)
    # Deterministic parameter init (PyTorch-Linear-like uniform fan-in scaling).
    w1 = jax.random.uniform(k_w1, (dims, hidden), jnp.float32,
                            minval=-1.0, maxval=1.0) / jnp.sqrt(dims)
    b1 = jax.random.uniform(k_b1, (hidden,), jnp.float32,
                            minval=-1.0, maxval=1.0) / jnp.sqrt(dims)
    w2 = jax.random.uniform(k_w2, (hidden, hidden), jnp.float32,
                            minval=-1.0, maxval=1.0) / jnp.sqrt(hidden)
    b2 = jax.random.uniform(k_b2, (hidden,), jnp.float32,
                            minval=-1.0, maxval=1.0) / jnp.sqrt(hidden)

    # One-time (model-load style) cast to persistent bf16 weights — no per-call
    # wrapper .astype of the big operands in the hot path.
    w1s, b1s, w2s, b2s = prepare_time_embedding_params(w1, b1, w2, b2)

    # Reference uses the SAME stored precision as the kernel inputs so the
    # tolerance check only reflects in-kernel bf16 activation casts.
    ref = reference(t, w1s.astype(jnp.float32), b1s,
                    w2s.astype(jnp.float32), b2s)

    # Small-batch (recompute, "parallel") path — the default at B=8.
    out = jax.block_until_ready(time_embedding(t, w1s, b1s, w2s, b2s))
    assert out.shape == (B, hidden)
    assert out.dtype == jnp.float32
    assert jnp.allclose(out, ref, atol=5e-2, rtol=5e-2), \
        "recompute path mismatch vs reference"

    # Also exercise the large-batch (cached-h, "arbitrary") path.
    out_cached = jax.block_until_ready(
        time_embedding(t, w1s, b1s, w2s, b2s, cache_h=True))
    assert jnp.allclose(out_cached, ref, atol=5e-2, rtol=5e-2), \
        "cached path mismatch vs reference"

    print("KERNEL_OK")
</pallas_src>

<mosaic_0001>
module attributes {stable_mosaic.version = 11 : i64} {
  func.func @_recompute_kernel(%arg0: i32, %arg1: memref<8x64xf32, #tpu.memory_space<vmem>>, %arg2: memref<64x256xbf16, #tpu.memory_space<vmem>>, %arg3: memref<1x256xf32, #tpu.memory_space<vmem>>, %arg4: memref<256x128xbf16, #tpu.memory_space<vmem>>, %arg5: memref<1x128xf32, #tpu.memory_space<vmem>>, %arg6: memref<8x128xf32, #tpu.memory_space<vmem>>) attributes {dimension_semantics = [#tpu.dimension_semantics<parallel>], iteration_bounds = array<i64: 2>, scalar_prefetch = 0 : i64, scratch_operands = 0 : i64, tpu.core_type = #tpu.core_type<tc>, window_params = [{pipeline_mode = #tpu.pipeline_mode<synchronous>, transform_indices = @transform_0, window_bounds = array<i64: 8, 64>}, {pipeline_mode = #tpu.pipeline_mode<synchronous>, transform_indices = @transform_1, window_bounds = array<i64: 64, 256>}, {pipeline_mode = #tpu.pipeline_mode<synchronous>, transform_indices = @transform_2, window_bounds = array<i64: 1, 256>}, {transform_indices = @transform_3, window_bounds = array<i64: 256, 128>}, {transform_indices = @transform_4, window_bounds = array<i64: 1, 128>}, {transform_indices = @transform_5, window_bounds = array<i64: 8, 128>}]} {
    %c0 = arith.constant 0 : index
    %c0_0 = arith.constant 0 : index
    %0 = vector.load %arg1[%c0, %c0_0] : memref<8x64xf32, #tpu.memory_space<vmem>>, vector<8x64xf32>
    %1 = arith.truncf %0 : vector<8x64xf32> to vector<8x64xbf16>
    %c0_1 = arith.constant 0 : index
    %c0_2 = arith.constant 0 : index
    %2 = vector.load %arg2[%c0_1, %c0_2] : memref<64x256xbf16, #tpu.memory_space<vmem>>, vector<64x256xbf16>
    %cst = arith.constant dense<0.000000e+00> : vector<8x256xf32>
    %3 = tpu.matmul %1, %2, %cst {dimension_numbers = #tpu.dot_dimension_numbers<[1], [0], [0], [1], [0, 0, 1, 1], [], []>} : vector<8x64xbf16>, vector<64x256xbf16>, vector<8x256xf32> -> vector<8x256xf32>
    %c0_3 = arith.constant 0 : index
    %c0_4 = arith.constant 0 : index
    %4 = vector.load %arg3[%c0_3, %c0_4] : memref<1x256xf32, #tpu.memory_space<vmem>>, vector<1x256xf32>
    %5 = vector.broadcast %4 : vector<1x256xf32> to vector<8x256xf32>
    %6 = arith.addf %3, %5 : vector<8x256xf32>
    %7 = arith.negf %6 : vector<8x256xf32>
    %8 = math.exp %7 : vector<8x256xf32>
    %cst_5 = arith.constant 1.000000e+00 : f32
    %9 = vector.broadcast %cst_5 : f32 to vector<8x256xf32>
    %10 = arith.addf %9, %8 : vector<8x256xf32>
    %11 = arith.divf %9, %10 : vector<8x256xf32>
    %12 = arith.mulf %6, %11 : vector<8x256xf32>
    %13 = arith.truncf %12 : vector<8x256xf32> to vector<8x256xbf16>
    %c0_6 = arith.constant 0 : index
    %c0_7 = arith.constant 0 : index
    %14 = vector.load %arg4[%c0_6, %c0_7] : memref<256x128xbf16, #tpu.memory_space<vmem>>, vector<256x128xbf16>
    %cst_8 = arith.constant dense<0.000000e+00> : vector<8x128xf32>
    %15 = tpu.matmul %13, %14, %cst_8 {dimension_numbers = #tpu.dot_dimension_numbers<[1], [0], [0], [1], [0, 0, 1, 1], [], []>} : vector<8x256xbf16>, vector<256x128xbf16>, vector<8x128xf32> -> vector<8x128xf32>
    %c0_9 = arith.constant 0 : index
    %c0_10 = arith.constant 0 : index
    %16 = vector.load %arg5[%c0_9, %c0_10] : memref<1x128xf32, #tpu.memory_space<vmem>>, vector<1x128xf32>
    %17 = vector.broadcast %16 : vector<1x128xf32> to vector<8x128xf32>
    %18 = arith.addf %15, %17 : vector<8x128xf32>
    %c0_11 = arith.constant 0 : index
    %c0_12 = arith.constant 0 : index
    %19 = vector.load %arg6[%c0_11, %c0_12] : memref<8x128xf32, #tpu.memory_space<vmem>>, vector<8x128xf32>
    tpu.vector_store %arg6[%c0_11, %c0_12], %18 {strides = array<i32>} : memref<8x128xf32, #tpu.memory_space<vmem>>, vector<8x128xf32>,
    return
  }
  func.func @transform_0(%arg0: i32) -> (i32, i32) {
    %c0_i32 = arith.constant 0 : i32
    %c0_i32_0 = arith.constant 0 : i32
    %c0_i32_1 = arith.constant 0 : i32
    return %c0_i32, %c0_i32_0 : i32, i32
  }
  func.func @transform_1(%arg0: i32) -> (i32, i32) {
    %c0_i32 = arith.constant 0 : i32
    %c0_i32_0 = arith.constant 0 : i32
    %c0_i32_1 = arith.constant 0 : i32
    return %c0_i32, %c0_i32_0 : i32, i32
  }
  func.func @transform_2(%arg0: i32) -> (i32, i32) {
    %c0_i32 = arith.constant 0 : i32
    %c0_i32_0 = arith.constant 0 : i32
    %c0_i32_1 = arith.constant 0 : i32
    return %c0_i32, %c0_i32_0 : i32, i32
  }
  func.func @transform_3(%arg0: i32) -> (i32, i32) {
    %c0_i32 = arith.constant 0 : i32
    %c0_i32_0 = arith.constant 0 : i32
    return %c0_i32, %arg0 : i32, i32
  }
  func.func @transform_4(%arg0: i32) -> (i32, i32) {
    %c0_i32 = arith.constant 0 : i32
    %c0_i32_0 = arith.constant 0 : i32
    return %c0_i32, %arg0 : i32, i32
  }
  func.func @transform_5(%arg0: i32) -> (i32, i32) {
    %c0_i32 = arith.constant 0 : i32
    %c0_i32_0 = arith.constant 0 : i32
    return %c0_i32, %arg0 : i32, i32
  }
}

</mosaic_0001>

<llo_original>
// kernel: tpu_custom_call.1
$region0: #{tpu_custom_call.1}
  #allocation0 [shape = 'u32[]', space=smem, size = 0x4, offset = 0x4, fixed_abs, tag = 'smem constant byte address 0x4 - core index']
  #allocation1 [shape = 'u32[144,128]{1,0:T(1,128)}', space=vmem, size = 0x12000, scoped, tag = 'internal scratch']
  %s0 = inlined_call_operand.hbm [shape: f32[8,64], index: 0, kind: input, shape index: {}]
  %s1 = inlined_call_operand.hbm [shape: bf16[64,256], index: 1, kind: input, shape index: {}]
  %s2 = inlined_call_operand.vmem [shape: f32[1,256], index: 2, kind: input, shape index: {}]
  %s3 = inlined_call_operand.hbm [shape: bf16[256,256], index: 3, kind: input, shape index: {}]
  %s4 = inlined_call_operand.vmem [shape: f32[1,256], index: 4, kind: input, shape index: {}]
  %s5 = inlined_call_operand.hbm [shape: f32[8,256], index: 5, kind: output, shape index: {}]
  %s6 = sld [smem:[#allocation0]]
  $region65: #{tpu_custom_call.1} parent=0
    _
  %s8 = ssub.s32 1, %s6
  %s9 = scalar_select 0, %s8, %s6
  $region1: #{tpu_custom_call.1} parent=0
    #allocation2 [shape = 'u8[4096]{0}', space=vmem, size = 0x1000, scoped, tag = 'input window, operand 0, single buffered']
    #allocation3 [shape = 's32[2]{0}', space=sflag, size = 0x8, scoped, tag = 'scoped memory for tpu_custom_call.1']
    #allocation4 [shape = 's32[2]{0}', space=sflag, size = 0x8, scoped, tag = 'scoped memory for tpu_custom_call.1']
    #allocation5 [shape = 'u8[32768]{0}', space=vmem, size = 0x8000, scoped, tag = 'input window, operand 1, single buffered']
    #allocation6 [shape = 's32[1]{0}', space=sflag, size = 0x4, scoped, tag = 'scoped memory for tpu_custom_call.1']
    #allocation7 [shape = 'u8[131072]{0}', space=vmem, size = 0x20000, scoped, tag = 'input window, operand 3']
    #allocation8 [shape = 'u8[8192]{0}', space=vmem, size = 0x2000, scoped, tag = 'output window, operand 0']
    %10 = vsyncpa [#allocation3], 0
    %11 = vsyncpa [#allocation6], 0
    %12 = vsyncpa [#allocation4], 0
    %s13 = scalar_lea.sflag [#allocation4], 1
    %14 = vsyncpa %s13, 0
    loop: start=0, step=1, limit=4
    $region2: #{tpu_custom_call.1} parent=1 // loop_pre_header
      _
    $region3: #{tpu_custom_call.1} parent=1 // loop_header
      %s16 = sphi 0, %s20
      %p17 = scmp.ge.s32.totalorder %s16, 4
      %s24 = sphi 0, %s24
      %s26 = sphi 0, %s24
      %s27 = sphi 0, %s26
      %s41 = sphi 0, %s27
      %s45 = sphi 0, %s45
      %s47 = sphi 0, %s45
      %s48 = sphi 0, %s47
      %s62 = sphi 0, %s48
      %s66 = sphi 0, %s66
      %s68 = sphi 0, %s66
      %s69 = sphi 0, %s68
      %s83 = sphi 0, %s69
      %s89 = sphi 0, %s91
      %s92 = sphi 0, %s89
      %s93 = sphi 0, %s92
      %s109 = sphi 0, %s93
      %s115 = sphi 0, %s117
      %s118 = sphi 0, %s115
      %s119 = sphi 0, %s118
      %s135 = sphi 0, %s119
      %s141 = sphi 0, %s143
      %s144 = sphi 0, %s141
      %s145 = sphi 0, %s144
      %s161 = sphi 0, %s145
    $region4: #{tpu_custom_call.1} parent=1 // loop_header_branch
      %19 = sbr.rel (%p17) target = $region8
    $region5: #{tpu_custom_call.1} parent=1 // loop_body
      %s21 = ssub.s32 %s16, 1
      %s22 = ssub.s32 %s16, 2
      %s23 = sadd.s32 %s16, 1
      %s25 = sadd.s32 %s24, 1
      %p28 = scmp.eq.s32.totalorder %s16, 1
      %p29 = scmp.ne.s32.totalorder %s24, %s26
      %p30 = scmp.eq.s32.totalorder %s16, 0
      %p31 = por %p29, %p30
      %p32 = scmp.ne.s32.totalorder %s24, %s26
      %p33 = scmp.eq.s32.totalorder %s21, 1
      %p34 = por %p32, %p33
      %p35 = scmp.ne.s32.totalorder %s26, %s27
      %p36 = scmp.eq.s32.totalorder %s21, 0
      %p37 = por %p35, %p36
      %p38 = scmp.ne.s32.totalorder %s26, %s27
      %p39 = scmp.eq.s32.totalorder %s22, 1
      %p40 = por %p38, %p39
      %p42 = scmp.ne.s32.totalorder %s27, %s41
      %p43 = scmp.eq.s32.totalorder %s22, 0
      %p44 = por %p42, %p43
      %s46 = sadd.s32 %s45, 1
      %p49 = scmp.eq.s32.totalorder %s16, 1
      %p50 = scmp.ne.s32.totalorder %s45, %s47
      %p51 = scmp.eq.s32.totalorder %s16, 0
      %p52 = por %p50, %p51
      %p53 = scmp.ne.s32.totalorder %s45, %s47
      %p54 = scmp.eq.s32.totalorder %s21, 1
      %p55 = por %p53, %p54
      %p56 = scmp.ne.s32.totalorder %s47, %s48
      %p57 = scmp.eq.s32.totalorder %s21, 0
      %p58 = por %p56, %p57
      %p59 = scmp.ne.s32.totalorder %s47, %s48
      %p60 = scmp.eq.s32.totalorder %s22, 1
      %p61 = por %p59, %p60
      %p63 = scmp.ne.s32.totalorder %s48, %s62
      %p64 = scmp.eq.s32.totalorder %s22, 0
      %p65 = por %p63, %p64
      %s67 = sadd.s32 %s66, 1
      %p70 = scmp.eq.s32.totalorder %s16, 1
      %p71 = scmp.ne.s32.totalorder %s66, %s68
      %p72 = scmp.eq.s32.totalorder %s16, 0
      %p73 = por %p71, %p72
      %p74 = scmp.ne.s32.totalorder %s66, %s68
      %p75 = scmp.eq.s32.totalorder %s21, 1
      %p76 = por %p74, %p75
      %p77 = scmp.ne.s32.totalorder %s68, %s69
      %p78 = scmp.eq.s32.totalorder %s21, 0
      %p79 = por %p77, %p78
      %p80 = scmp.ne.s32.totalorder %s68, %s69
      %p81 = scmp.eq.s32.totalorder %s22, 1
      %p82 = por %p80, %p81
      %p84 = scmp.ne.s32.totalorder %s69, %s83
      %p85 = scmp.eq.s32.totalorder %s22, 0
      %p86 = por %p84, %p85
      %s87 = ssub.s32 %s16, %s23
      %p88 = scmp.eq.s32.totalorder %s87, 0
      %s90 = sadd.s32 %s89, 1
      %s91 = scalar_select %p88, %s89, %s90
      %p94 = pneg %p88
      %p95 = scmp.eq.s32.totalorder %s16, 1
      %p96 = por %p94, %p95
      %p97 = scmp.ne.s32.totalorder %s89, %s92
      %p98 = scmp.eq.s32.totalorder %s16, 0
      %p99 = por %p97, %p98
      %p100 = scmp.ne.s32.totalorder %s89, %s92
      %p101 = scmp.eq.s32.totalorder %s21, 1
      %p102 = por %p100, %p101
      %p103 = scmp.ne.s32.totalorder %s92, %s93
      %p104 = scmp.eq.s32.totalorder %s21, 0
      %p105 = por %p103, %p104
      %p106 = scmp.ne.s32.totalorder %s92, %s93
      %p107 = scmp.eq.s32.totalorder %s22, 1
      %p108 = por %p106, %p107
      %p110 = scmp.ne.s32.totalorder %s93, %s109
      %p111 = scmp.eq.s32.totalorder %s22, 0
      %p112 = por %p110, %p111
      %s113 = ssub.s32 %s16, %s23
      %p114 = scmp.eq.s32.totalorder %s113, 0
      %s116 = sadd.s32 %s115, 1
      %s117 = scalar_select %p114, %s115, %s116
      %p120 = pneg %p114
      %p121 = scmp.eq.s32.totalorder %s16, 1
      %p122 = por %p120, %p121
      %p123 = scmp.ne.s32.totalorder %s115, %s118
      %p124 = scmp.eq.s32.totalorder %s16, 0
      %p125 = por %p123, %p124
      %p126 = scmp.ne.s32.totalorder %s115, %s118
      %p127 = scmp.eq.s32.totalorder %s21, 1
      %p128 = por %p126, %p127
      %p129 = scmp.ne.s32.totalorder %s118, %s119
      %p130 = scmp.eq.s32.totalorder %s21, 0
      %p131 = por %p129, %p130
      %p132 = scmp.ne.s32.totalorder %s118, %s119
      %p133 = scmp.eq.s32.totalorder %s22, 1
      %p134 = por %p132, %p133
      %p136 = scmp.ne.s32.totalorder %s119, %s135
      %p137 = scmp.eq.s32.totalorder %s22, 0
      %p138 = por %p136, %p137
      %s139 = ssub.s32 %s16, %s23
      %p140 = scmp.eq.s32.totalorder %s139, 0
      %s142 = sadd.s32 %s141, 1
      %s143 = scalar_select %p140, %s141, %s142
      %p146 = pneg %p140
      %p147 = scmp.eq.s32.totalorder %s16, 1
      %p148 = por %p146, %p147
      %p149 = scmp.ne.s32.totalorder %s141, %s144
      %p150 = scmp.eq.s32.totalorder %s16, 0
      %p151 = por %p149, %p150
      %p152 = scmp.ne.s32.totalorder %s141, %s144
      %p153 = scmp.eq.s32.totalorder %s21, 1
      %p154 = por %p152, %p153
      %p155 = scmp.ne.s32.totalorder %s144, %s145
      %p156 = scmp.eq.s32.totalorder %s21, 0
      %p157 = por %p155, %p156
      %p158 = scmp.ne.s32.totalorder %s144, %s145
      %p159 = scmp.eq.s32.totalorder %s22, 1
      %p160 = por %p158, %p159
      %p162 = scmp.ne.s32.totalorder %s145, %s161
      %p163 = scmp.eq.s32.totalorder %s22, 0
      %p164 = por %p162, %p163
      %p165 = scmp.le.s32.totalorder 1, %s16
      %p166 = scmp.lt.s32.totalorder %s16, 3
      %p167 = pnand %p165, %p166
      %p168 = pneg %p167
      // Predicated region
      $region9: #{tpu_custom_call.1} parent=5 // pred_check
        _
      $region10: #{tpu_custom_call.1} parent=5 // pred_check_branch
        %170 = sbr.rel (%p167) target = $region12
      $region11: #{tpu_custom_call.1} parent=5 // pred_region
        %s171 = ssub.s32 %s16, 1
        // Predicated region
        $region13: #{tpu_custom_call.1} parent=11 // pred_check
          %p172 = pneg %p37
        $region14: #{tpu_custom_call.1} parent=11 // pred_check_branch
          %174 = sbr.rel (%p172) target = $region16
        $region15: #{tpu_custom_call.1} parent=11 // pred_region
          %s176 = ssub.s32 128, 128
          %177 = vsyncadd [#allocation3], %s176
          %s179 = sshll.u32 [#allocation2], 4
          %s180 = int_to_ptr.vmem [resolvable:$true] %s179
          %182 = dma.hbm_to_vmem [thread:$0]  %s0, 128, %s180, [#allocation3]
        $region16: #{tpu_custom_call.1} parent=11 // pred_fallthru
          _
        // Predicated region
        $region17: #{tpu_custom_call.1} parent=11 // pred_check
          %p183 = pneg %p58
        $region18: #{tpu_custom_call.1} parent=11 // pred_check_branch
          %185 = sbr.rel (%p183) target = $region20
        $region19: #{tpu_custom_call.1} parent=11 // pred_region
          %s187 = ssub.s32 1024, 1024
          %188 = vsyncadd [#allocation6], %s187
          %s189 = sshll.u32 [#allocation5], 4
          %s190 = int_to_ptr.vmem [resolvable:$true] %s189
          %195 = dma.hbm_to_vmem [thread:$0]  %s1, 1024, %s190, [#allocation6], 128, 128, 8
        $region20: #{tpu_custom_call.1} parent=11 // pred_fallthru
          _
        // Predicated region
        $region21: #{tpu_custom_call.1} parent=11 // pred_check
          %p196 = pneg %p79
        $region22: #{tpu_custom_call.1} parent=11 // pred_check_branch
          %198 = sbr.rel (%p196) target = $region24
        $region23: #{tpu_custom_call.1} parent=11 // pred_region
          _
        $region24: #{tpu_custom_call.1} parent=11 // pred_fallthru
          _
      $region12: #{tpu_custom_call.1} parent=5 // pred_fallthru
        _
      %p199 = scmp.lt.s32.totalorder %s16, 2
      // Predicated region
      $region25: #{tpu_custom_call.1} parent=5 // pred_check
        %p200 = pneg %p199
      $region26: #{tpu_custom_call.1} parent=5 // pred_check_branch
        %202 = sbr.rel (%p200) target = $region28
      $region27: #{tpu_custom_call.1} parent=5 // pred_region
        // Predicated region
        $region29: #{tpu_custom_call.1} parent=27 // pred_check
          %p203 = pneg %p99
        $region30: #{tpu_custom_call.1} parent=27 // pred_check_branch
          %205 = sbr.rel (%p203) target = $region32
        $region31: #{tpu_custom_call.1} parent=27 // pred_region
          %s206 = sand.u32 %s16, 1
          %s207 = scalar_lea.sflag [#allocation3], %s206
          %s208 = sand.u32 %s89, 1
          %s209 = smul.addr %s208, 128
          %s210 = scalar_lea.vmem [#allocation7], %s209
          %s212 = ssub.s32 2048, 2048
          %213 = vsyncadd %s207, %s212
          %s214 = smul.addr %s16, 64
          %s215 = scalar_lea.hbm %s3, %s214
          %s216 = sshll.u32 %s210, 4
          %s217 = int_to_ptr.vmem [resolvable:$true] %s216
          %222 = dma.hbm_to_vmem [thread:$0]  %s215, 2048, %s217, %s207, 128, 64, 4
        $region32: #{tpu_custom_call.1} parent=27 // pred_fallthru
          _
        // Predicated region
        $region33: #{tpu_custom_call.1} parent=27 // pred_check
          %p223 = pneg %p125
        $region34: #{tpu_custom_call.1} parent=27 // pred_check_branch
          %225 = sbr.rel (%p223) target = $region36
        $region35: #{tpu_custom_call.1} parent=27 // pred_region
          %p226 = scmp.lt.s32.totalorder %s16, 1
          %s227 = scalar_select %p226, %s16, 1
          %s228 = scalar_lea.vmem %s4, %s227
        $region36: #{tpu_custom_call.1} parent=27 // pred_fallthru
          _
      $region28: #{tpu_custom_call.1} parent=5 // pred_fallthru
        _
      %p229 = scmp.le.s32.totalorder 1, %s16
      %p230 = scmp.lt.s32.totalorder %s16, 3
      %p231 = pnand %p229, %p230
      %p232 = pneg %p231
      // Predicated region
      $region37: #{tpu_custom_call.1} parent=5 // pred_check
        _
      $region38: #{tpu_custom_call.1} parent=5 // pred_check_branch
        %234 = sbr.rel (%p231) target = $region40
      $region39: #{tpu_custom_call.1} parent=5 // pred_region
        %s235 = ssub.s32 %s16, 1
        // Predicated region
        $region41: #{tpu_custom_call.1} parent=39 // pred_check
          %p236 = pneg %p37
        $region42: #{tpu_custom_call.1} parent=39 // pred_check_branch
          %238 = sbr.rel (%p236) target = $region44
        $region43: #{tpu_custom_call.1} parent=39 // pred_region
          %239 = dma.done [#allocation3], 128
        $region44: #{tpu_custom_call.1} parent=39 // pred_fallthru
          _
        // Predicated region
        $region45: #{tpu_custom_call.1} parent=39 // pred_check
          %p240 = pneg %p58
        $region46: #{tpu_custom_call.1} parent=39 // pred_check_branch
          %242 = sbr.rel (%p240) target = $region48
        $region47: #{tpu_custom_call.1} parent=39 // pred_region
          %243 = dma.done [#allocation6], 1024
        $region48: #{tpu_custom_call.1} parent=39 // pred_fallthru
          _
        %s244 = sand.u32 %s21, 1
        %s245 = scalar_lea.sflag [#allocation3], %s244
        %s246 = sand.u32 %s92, 1
        %s247 = smul.addr %s246, 128
        %s248 = scalar_lea.vmem [#allocation7], %s247
        // Predicated region
        $region49: #{tpu_custom_call.1} parent=39 // pred_check
          %p249 = pneg %p105
        $region50: #{tpu_custom_call.1} parent=39 // pred_check_branch
          %251 = sbr.rel (%p249) target = $region52
        $region51: #{tpu_custom_call.1} parent=39 // pred_region
          %252 = dma.done %s245, 2048
        $region52: #{tpu_custom_call.1} parent=39 // pred_fallthru
          _
        %p253 = pneg %p37
        %p254 = pneg %p34
        %p255 = pneg %p58
        %p256 = pneg %p55
        %p257 = pneg %p79
        %p258 = pneg %p76
        %s259 = sand.u32 %s21, 1
        %s260 = scalar_lea.sflag [#allocation3], %s259
        %s261 = sand.u32 %s92, 1
        %s262 = smul.addr %s261, 128
        %s263 = scalar_lea.vmem [#allocation7], %s262
        %p264 = pneg %p105
        %p265 = pneg %p102
        %p266 = scmp.lt.s32.totalorder %s21, 1
        %s267 = scalar_select %p266, %s21, 1
        %s268 = scalar_lea.vmem %s4, %s267
        %p269 = pneg %p131
        %p270 = pneg %p128
        %p271 = pneg %p157
        %p272 = pneg %p154
        %s273 = sand.u32 %s144, 1
        %s274 = scalar_lea.sflag [#allocation4], %s273
        %s275 = sand.u32 %s144, 1
        %s276 = smul.addr %s275, 8
        %s277 = scalar_lea.vmem [#allocation8], %s276
        %p278 = scmp.lt.s32.totalorder %s21, 1
        %s279 = scalar_select %p278, %s21, 1
        %s280 = scalar_lea.vmem %s4, %s279
        %v282 = vld [vmem:[#allocation2] sm:$0xff]
        %v283 = vpack.c.bf16 %v282, %v282
        %v284 = vld [vmem:[#allocation5] sm:$0xff]
        %v285 = vld [vmem:[#allocation5 + $0x8] sm:$0xff]
        %v286 = vld [vmem:[#allocation5 + $0x10] sm:$0xff]
        %v287 = vld [vmem:[#allocation5 + $0x18] sm:$0xff]
        %v288 = vld [vmem:[#allocation5 + $0x20] sm:$0xff]
        %v289 = vld [vmem:[#allocation5 + $0x28] sm:$0xff]
        %v290 = vld [vmem:[#allocation5 + $0x30] sm:$0xff]
        %v291 = vld [vmem:[#allocation5 + $0x38] sm:$0xff]
        %v292 = vld [vmem:[%s2] sm:$0x3]
        %v294 = vlaneseq
        %v295 = vshrl.u32 %v294, 7
        %v296 = vsub.s32 0, %v295
        %v297 = vrot.slane %v292, %v296
        %v298 = vlaneseq
        %v299 = vshrl.u32 %v298, 7
        %v300 = vsub.s32 1, %v299
        %v301 = vrot.slane %v292, %v300
        %v312 = vunpack.c.l.b16 %v284
        %v313 = vunpack.c.h.b16 %v284
        %v314 = vunpack.c.l.b16 %v285
        %v315 = vunpack.c.h.b16 %v285
        %v316 = vunpack.c.l.b16 %v286
        %v317 = vunpack.c.h.b16 %v286
        %v318 = vunpack.c.l.b16 %v287
        %v319 = vunpack.c.h.b16 %v287
        %v320 = vunpack.c.l.b16 %v288
        %v321 = vunpack.c.h.b16 %v288
        %v322 = vunpack.c.l.b16 %v289
        %v323 = vunpack.c.h.b16 %v289
        %v324 = vunpack.c.l.b16 %v290
        %v325 = vunpack.c.h.b16 %v290
        %v326 = vunpack.c.l.b16 %v291
        %v327 = vunpack.c.h.b16 %v291
        %v328 = vpack.c.b16 %v314, %v312
        %v329 = vpack.c.b16 %v315, %v313
        %v330 = vpack.c.b16 %v318, %v316
        %v331 = vpack.c.b16 %v319, %v317
        %v332 = vpack.c.b16 %v322, %v320
        %v333 = vpack.c.b16 %v323, %v321
        %v334 = vpack.c.b16 %v326, %v324
        %v335 = vpack.c.b16 %v327, %v325
        %vm344 = vcmask 523264
        %v346 = vsel %vm344, %v283, 0
        %348 = vmatprep.subr.bf16.mxu0 %v329
        %349 = vmatpush1.bf16.msra.mxu0 %v328
        %350 = vmatprep.subr.bf16.mxu0 %v331
        %351 = vmatpush1.bf16.msra.mxu0 %v330
        %352 = vmatprep.subr.bf16.mxu0 %v333
        %353 = vmatpush1.bf16.msra.mxu0 %v332
        %354 = vmatprep.subr.bf16.mxu0 %v335
        %355 = vmatpush1.bf16.msra.mxu0 %v334
        %356 = vmatprep.subr.bf16.mxu0 0
        %357 = vmatpush1.bf16.msra.mxu0 0
        %358 = vmatprep.subr.bf16.mxu0 0
        %359 = vmatpush1.bf16.msra.mxu0 0
        %360 = vmatprep.subr.bf16.mxu0 0
        %361 = vmatpush1.bf16.msra.mxu0 0
        %362 = vmatprep.subr.bf16.mxu0 0
        %363 = vmatpush1.bf16.msra.mxu0 0
        %364 = vmatprep.subr.bf16.mxu0 0
        %365 = vmatpush1.bf16.msra.mxu0 0
        %366 = vmatprep.subr.bf16.mxu0 0
        %367 = vmatpush1.bf16.msra.mxu0 0
        %368 = vmatprep.subr.bf16.mxu0 0
        %369 = vmatpush1.bf16.msra.mxu0 0
        %370 = vmatprep.subr.bf16.mxu0 0
        %371 = vmatpush1.bf16.msra.mxu0 0
        %372 = vmatprep.subr.bf16.mxu0 0
        %373 = vmatpush1.bf16.msra.mxu0 0
        %374 = vmatprep.subr.bf16.mxu0 0
        %375 = vmatpush1.bf16.msra.mxu0 0
        %376 = vmatprep.subr.bf16.mxu0 0
        %377 = vmatpush1.bf16.msra.mxu0 0
        %378 = vmatprep.subr.bf16.mxu0 0
        %379 = vmatpush1.bf16.msra.mxu0 0
        %380 = vmatprep.mubr.bf16.mxu0 0
        %381 = vmatmul.mubr.bf16.gmra.mrb[0].mxu0 %v346
        %v382 = vpop.f32.mrb[0].mxu0
        %v383 = vadd.f32 %v297, %v382
        %v384 = vpop.f32.mrb[0].mxu0
        %v385 = vadd.f32 %v301, %v384
        %v386 = vpop.f32.mrb[0].mxu0
        %v387 = vpop.f32.mrb[0].mxu0
        %388 = vdwg.mxu0
        %v389 = vxor.u32 %v383, 2147483648
        %v390 = vxor.u32 %v385, 2147483648
        %v391 = vmul.f32 %v389, 1.442695
        %v392 = vpow.pop %v391
        %v393 = vmul.f32 %v390, 1.442695
        %v394 = vpow.pop %v393
        %v395 = vadd.f32 %v392, 1.0
        %v396 = vadd.f32 %v394, 1.0
        %v397 = vrcp.pop %v395
        %v398 = vmul.f32 1.0, %v397
        %v399 = vrcp.pop %v396
        %v400 = vmul.f32 1.0, %v399
        %v401 = vmul.f32 %v383, %v398
        %v402 = vmul.f32 %v385, %v400
        %v403 = vpack.c.bf16 %v401, %v401
        %v404 = vpack.c.bf16 %v402, %v402
        %v405 = vld [vmem:[%s248] sm:$0xf]
        %v406 = vld [vmem:[%s248 + $0x4] sm:$0xf]
        %v407 = vld [vmem:[%s248 + $0x8] sm:$0xf]
        %v408 = vld [vmem:[%s248 + $0xc] sm:$0xf]
        %v409 = vld [vmem:[%s248 + $0x10] sm:$0xf]
        %v410 = vld [vmem:[%s248 + $0x14] sm:$0xf]
        %v411 = vld [vmem:[%s248 + $0x18] sm:$0xf]
        %v412 = vld [vmem:[%s248 + $0x1c] sm:$0xf]
        %v413 = vld [vmem:[%s248 + $0x20] sm:$0xf]
        %v414 = vld [vmem:[%s248 + $0x24] sm:$0xf]
        %v415 = vld [vmem:[%s248 + $0x28] sm:$0xf]
        %v416 = vld [vmem:[%s248 + $0x2c] sm:$0xf]
        %v417 = vld [vmem:[%s248 + $0x30] sm:$0xf]
        %v418 = vld [vmem:[%s248 + $0x34] sm:$0xf]
        %v419 = vld [vmem:[%s248 + $0x38] sm:$0xf]
        %v420 = vld [vmem:[%s248 + $0x3c] sm:$0xf]
        %v421 = vld [vmem:[%s248 + $0x40] sm:$0xf]
        %v422 = vld [vmem:[%s248 + $0x44] sm:$0xf]
        %v423 = vld [vmem:[%s248 + $0x48] sm:$0xf]
        %v424 = vld [vmem:[%s248 + $0x4c] sm:$0xf]
        %v425 = vld [vmem:[%s248 + $0x50] sm:$0xf]
        %v426 = vld [vmem:[%s248 + $0x54] sm:$0xf]
        %v427 = vld [vmem:[%s248 + $0x58] sm:$0xf]
        %v428 = vld [vmem:[%s248 + $0x5c] sm:$0xf]
        %v429 = vld [vmem:[%s248 + $0x60] sm:$0xf]
        %v430 = vld [vmem:[%s248 + $0x64] sm:$0xf]
        %v431 = vld [vmem:[%s248 + $0x68] sm:$0xf]
        %v432 = vld [vmem:[%s248 + $0x6c] sm:$0xf]
        %v433 = vld [vmem:[%s248 + $0x70] sm:$0xf]
        %v434 = vld [vmem:[%s248 + $0x74] sm:$0xf]
        %v435 = vld [vmem:[%s248 + $0x78] sm:$0xf]
        %v436 = vld [vmem:[%s248 + $0x7c] sm:$0xf]
        %v437 = vld [vmem:[%s280] sm:$0x1]
        %v439 = vlaneseq
        %v440 = vshrl.u32 %v439, 7
        %v441 = vsub.s32 0, %v440
        %v442 = vrot.slane %v437, %v441
        %v476 = vunpack.c.l.b16 %v405
        %v477 = vunpack.c.l.b16 %v406
        %v478 = vunpack.c.l.b16 %v407
        %v479 = vunpack.c.l.b16 %v408
        %v480 = vunpack.c.l.b16 %v409
        %v481 = vunpack.c.l.b16 %v410
        %v482 = vunpack.c.l.b16 %v411
        %v483 = vunpack.c.l.b16 %v412
        %v484 = vunpack.c.l.b16 %v413
        %v485 = vunpack.c.l.b16 %v414
        %v486 = vunpack.c.l.b16 %v415
        %v487 = vunpack.c.l.b16 %v416
        %v488 = vunpack.c.l.b16 %v417
        %v489 = vunpack.c.l.b16 %v418
        %v490 = vunpack.c.l.b16 %v419
        %v491 = vunpack.c.l.b16 %v420
        %v492 = vunpack.c.l.b16 %v421
        %v493 = vunpack.c.l.b16 %v422
        %v494 = vunpack.c.l.b16 %v423
        %v495 = vunpack.c.l.b16 %v424
        %v496 = vunpack.c.l.b16 %v425
        %v497 = vunpack.c.l.b16 %v426
        %v498 = vunpack.c.l.b16 %v427
        %v499 = vunpack.c.l.b16 %v428
        %v500 = vunpack.c.l.b16 %v429
        %v501 = vunpack.c.l.b16 %v430
        %v502 = vunpack.c.l.b16 %v431
        %v503 = vunpack.c.l.b16 %v432
        %v504 = vunpack.c.l.b16 %v433
        %v505 = vunpack.c.l.b16 %v434
        %v506 = vunpack.c.l.b16 %v435
        %v507 = vunpack.c.l.b16 %v436
        %v508 = vpack.c.b16 %v477, %v476
        %v509 = vpack.c.b16 %v479, %v478
        %v510 = vpack.c.b16 %v481, %v480
        %v511 = vpack.c.b16 %v483, %v482
        %v512 = vpack.c.b16 %v485, %v484
        %v513 = vpack.c.b16 %v487, %v486
        %v514 = vpack.c.b16 %v489, %v488
        %v515 = vpack.c.b16 %v491, %v490
        %v516 = vpack.c.b16 %v493, %v492
        %v517 = vpack.c.b16 %v495, %v494
        %v518 = vpack.c.b16 %v497, %v496
        %v519 = vpack.c.b16 %v499, %v498
        %v520 = vpack.c.b16 %v501, %v500
        %v521 = vpack.c.b16 %v503, %v502
        %v522 = vpack.c.b16 %v505, %v504
        %v523 = vpack.c.b16 %v507, %v506
        %540 = vmatprep.subr.bf16.mxu0 0
        %541 = vmatpush1.bf16.msra.mxu0 %v508
        %542 = vmatprep.subr.bf16.mxu0 0
        %543 = vmatpush1.bf16.msra.mxu0 %v509
        %544 = vmatprep.subr.bf16.mxu0 0
        %545 = vmatpush1.bf16.msra.mxu0 %v510
        %546 = vmatprep.subr.bf16.mxu0 0
        %547 = vmatpush1.bf16.msra.mxu0 %v511
        %548 = vmatprep.subr.bf16.mxu0 0
        %549 = vmatpush1.bf16.msra.mxu0 %v512
        %550 = vmatprep.subr.bf16.mxu0 0
        %551 = vmatpush1.bf16.msra.mxu0 %v513
        %552 = vmatprep.subr.bf16.mxu0 0
        %553 = vmatpush1.bf16.msra.mxu0 %v514
        %554 = vmatprep.subr.bf16.mxu0 0
        %555 = vmatpush1.bf16.msra.mxu0 %v515
        %556 = vmatprep.subr.bf16.mxu0 0
        %557 = vmatpush1.bf16.msra.mxu0 %v516
        %558 = vmatprep.subr.bf16.mxu0 0
        %559 = vmatpush1.bf16.msra.mxu0 %v517
        %560 = vmatprep.subr.bf16.mxu0 0
        %561 = vmatpush1.bf16.msra.mxu0 %v518
        %562 = vmatprep.subr.bf16.mxu0 0
        %563 = vmatpush1.bf16.msra.mxu0 %v519
        %564 = vmatprep.subr.bf16.mxu0 0
        %565 = vmatpush1.bf16.msra.mxu0 %v520
        %566 = vmatprep.subr.bf16.mxu0 0
        %567 = vmatpush1.bf16.msra.mxu0 %v521
        %568 = vmatprep.subr.bf16.mxu0 0
        %569 = vmatpush1.bf16.msra.mxu0 %v522
        %570 = vmatprep.subr.bf16.mxu0 0
        %571 = vmatpush1.bf16.msra.mxu0 %v523
        %572 = vmatprep.mubr.bf16.mxu0 %v404
        %573 = vmatmul.mubr.bf16.gmra.mrb[0].mxu0 %v403
        %v574 = vpop.f32.mrb[0].mxu0
        %v575 = vadd.f32 %v442, %v574
        %v576 = vpop.f32.mrb[0].mxu0
        %v577 = vpop.f32.mrb[0].mxu0
        %v578 = vpop.f32.mrb[0].mxu0
        %579 = vdwg.mxu0
        %580 = vst [vmem:[%s277] sm:$0xff] %v575
        %s581 = sand.u32 %s144, 1
        %s582 = scalar_lea.sflag [#allocation4], %s581
        %s583 = sand.u32 %s144, 1
        %s584 = smul.addr %s583, 8
        %s585 = scalar_lea.vmem [#allocation8], %s584
        // Predicated region
        $region53: #{tpu_custom_call.1} parent=39 // pred_check
          %p586 = pneg %p154
        $region54: #{tpu_custom_call.1} parent=39 // pred_check_branch
          %588 = sbr.rel (%p586) target = $region56
        $region55: #{tpu_custom_call.1} parent=39 // pred_region
          %s590 = ssub.s32 128, 128
          %591 = vsyncadd %s582, %s590
          %s592 = smul.addr %s21, 128
          %s593 = scalar_lea.hbm %s5, %s592
          %s595 = sshll.u32 %s585, 4
          %s596 = int_to_ptr.vmem [resolvable:$true] %s595
          %598 = dma.vmem_to_hbm [thread:$0]  %s596, 128, %s593, %s582
        $region56: #{tpu_custom_call.1} parent=39 // pred_fallthru
          _
      $region40: #{tpu_custom_call.1} parent=5 // pred_fallthru
        _
      %p599 = scmp.le.s32.totalorder 2, %s16
      // Predicated region
      $region57: #{tpu_custom_call.1} parent=5 // pred_check
        %p600 = pneg %p599
      $region58: #{tpu_custom_call.1} parent=5 // pred_check_branch
        %602 = sbr.rel (%p600) target = $region60
      $region59: #{tpu_custom_call.1} parent=5 // pred_region
        %s603 = ssub.s32 %s16, 2
        // Predicated region
        $region61: #{tpu_custom_call.1} parent=59 // pred_check
          %p604 = pneg %p160
        $region62: #{tpu_custom_call.1} parent=59 // pred_check_branch
          %606 = sbr.rel (%p604) target = $region64
        $region63: #{tpu_custom_call.1} parent=59 // pred_region
          %s607 = sand.u32 %s145, 1
          %s608 = scalar_lea.sflag [#allocation4], %s607
          %s609 = sand.u32 %s145, 1
          %s610 = smul.addr %s609, 8
          %s611 = scalar_lea.vmem [#allocation8], %s610
          %612 = dma.done %s608, 128
        $region64: #{tpu_custom_call.1} parent=59 // pred_fallthru
          _
      $region60: #{tpu_custom_call.1} parent=5 // pred_fallthru
        _
    $region6: #{tpu_custom_call.1} parent=1 // loop_footer
      %s20 = sadd.s32 1, %s16
    $region7: #{tpu_custom_call.1} parent=1 // loop_footer_branch
      %15 = sbr.rel target = $region3
    $region8: #{tpu_custom_call.1} parent=1 // loop_exit
      _
    %613 = vsyncpa [#allocation3], 1
    %s614 = scalar_lea.sflag [#allocation3], 1
    %615 = vsyncpa %s614, 1
    %616 = vsyncpa [#allocation6], 1
    %617 = vsyncpa [#allocation4], 1
    %s618 = scalar_lea.sflag [#allocation4], 1
    %619 = vsyncpa %s618, 1

</llo_original>
